<compile_context>
chip_gen: v7x
topology: tpu7x:2x2x1
jax: 0.10.0
libtpu: 0.0.40
codegen_flags: <defaults>
</compile_context>

<pallas_src>
import functools
import math

import numpy as np
import jax
import jax.numpy as jnp
from jax import lax
from jax.experimental import pallas as pl
from jax.experimental.pallas import tpu as pltpu

LANE = 128


def _round_up(n, m):
    return ((n + m - 1) // m) * m


# ----------------------------- Pallas kernel ------------------------------ #

def graph_transformer_kernel(x_ref, adj_ref, w_ref, b_ref, o_ref,
                             *, num_layers, heads, head_pad):
    """Fused forward over all layers.

    x_ref  : (N, C)      f32, feature-padded input (C = heads * head_pad, head_pad % 128 == 0)
    adj_ref: (N, N)      f32 {0,1}, adj[i, j] = 1  iff  edge j -> i exists
    w_ref  : (L, C, 4C)  bf16, per-layer fused [Wq|Wk|Wv|Wskip] (x @ W layout,
                         1/sqrt(head_dim) already folded into the Wq block)
    b_ref  : (L, 1, 4C)  f32, per-layer fused [bq|bk|bv|bskip] (scale folded into bq)
    o_ref  : (N, C)      f32, padded output of the last layer (lane-dense store)
    """
    c = heads * head_pad
    x = x_ref[...]                                   # (N, C) f32, stays resident
    adj = adj_ref[...]                               # (N, N) f32

    # Hoisted additive edge mask: one compare+select for the whole call instead of
    # one per (layer, head).
    neg_mask = jnp.where(adj > 0.0, 0.0, -1e30)      # (N, N) f32

    for l in range(num_layers):                      # static unrolled layer loop
        xb = x.astype(jnp.bfloat16)
        # single fused projection: q | k | v | skip   (one 128x512 MXU pass)
        proj = jnp.dot(xb, w_ref[l], preferred_element_type=jnp.float32) + b_ref[l]
        q = proj[:, 0 * c:1 * c]                     # scale already folded in
        k = proj[:, 1 * c:2 * c]
        v = proj[:, 2 * c:3 * c]
        skip = proj[:, 3 * c:4 * c]

        head_outs = []
        for h in range(heads):                       # static loop (heads is tiny)
            sl = slice(h * head_pad, (h + 1) * head_pad)
            qh = q[:, sl].astype(jnp.bfloat16)       # (N, Dp)
            kh = k[:, sl].astype(jnp.bfloat16)       # (N, Dp)
            vh = v[:, sl].astype(jnp.bfloat16)       # (N, Dp)

            # scores s[i, j] = q_i . k_j  (scale pre-folded); contracting both last
            # dims keeps qh/kh lane-contiguous and lowers to a transposed-RHS matmul
            # without an explicit XLU transpose of kh.
            s = lax.dot_general(qh, kh, (((1,), (1,)), ((), ())),
                                preferred_element_type=jnp.float32)
            s = s + neg_mask                         # additive mask (hoisted)
            m = jnp.max(s, axis=-1, keepdims=True)
            # `* adj` is required so rows with NO incoming edges stay exactly zero
            # (m = -1e30 there would otherwise make exp(s - m) = 1 on masked lanes).
            e = jnp.exp(s - m) * adj
            denom = jnp.sum(e, axis=-1, keepdims=True)
            inv = pl.reciprocal(jnp.maximum(denom, 1e-30), approx=True)
            p = e * inv                              # isolated-node rows stay all-zero
            head_outs.append(jnp.dot(p.astype(jnp.bfloat16), vh,
                                     preferred_element_type=jnp.float32))

        attn = head_outs[0] if heads == 1 else jnp.concatenate(head_outs, axis=-1)
        x_new = attn + skip                          # root_weight skip connection
        if l != num_layers - 1:
            x_new = jnp.maximum(x_new, 0.0)          # norm=None -> Identity, then ReLU
        x = x_new

    o_ref[...] = x                                   # lane-dense (N, C) store


# ------------------------------ host wrapper ------------------------------- #

def graph_transformer_forward(x, edge_index, params, *, hidden, heads):
    """x: (N, in_channels) f32, edge_index: (2, E) int [source; target]."""
    n, cin = x.shape
    head_pad = _round_up(hidden, LANE)
    c = heads * head_pad
    assert cin <= c, "in_channels must fit in the padded feature width"

    # dense adjacency mask: adj[target, source] = 1  (flow source -> target)
    # TODO(synk): if N grows, pad N to a multiple of 128 and move to a bf16/int8
    # mask + row-blocked online softmax (see header notes).
    src, dst = np.asarray(edge_index)
    adj = np.zeros((n, n), dtype=np.float32)
    adj[dst, src] = 1.0
    adj = jnp.asarray(adj)

    # lane-pad the input features once
    xp = jnp.zeros((n, c), jnp.float32).at[:, :cin].set(x)

    w_all, b_all = params                            # (L, C, 4C) bf16, (L, 1, 4C) f32
    num_layers = w_all.shape[0]

    # Right-size scoped VMEM to the actual working set (inputs + output, with a
    # 2x pipelining factor and 1 MiB headroom) instead of a blanket 32 MiB.
    def _nbytes(a):
        return int(np.prod(a.shape)) * a.dtype.itemsize
    work = sum(_nbytes(a) for a in (xp, adj, w_all, b_all)) + n * c * 4
    vmem_limit = min(int(2 * work) + (1 << 20), 64 * 1024 * 1024)

    kernel = functools.partial(graph_transformer_kernel,
                               num_layers=num_layers, heads=heads,
                               head_pad=head_pad)
    vmem = pl.BlockSpec(memory_space=pltpu.MemorySpace.VMEM)
    out_p = pl.pallas_call(
        kernel,
        out_shape=jax.ShapeDtypeStruct((n, c), jnp.float32),
        in_specs=[vmem] * 4,
        out_specs=vmem,
        compiler_params=pltpu.CompilerParams(vmem_limit_bytes=vmem_limit),
    )(xp, adj, w_all, b_all)

    # slice the real channels back out (host-side, free XLA slice)
    if heads == 1:
        return out_p[:, :hidden]
    return jnp.concatenate(
        [out_p[:, h * head_pad:h * head_pad + hidden] for h in range(heads)], axis=-1)


# --------------------------- parameter init -------------------------------- #

def init_params(key, in_channels, hidden, num_layers, heads):
    """PyTorch nn.Linear-style uniform init for lin_query/key/value/skip of every
    TransformerConv layer; returns one lane-padded, layer-stacked fused weight
    (L, C, 4C) bf16 and bias (L, 1, 4C) f32, with the 1/sqrt(head_dim) attention
    scale folded into the Wq / bq blocks."""
    assert heads == 1 or num_layers == 1, \
        "module stacks layers with in_channels=hidden, which requires heads==1 (concat=True)"
    head_pad = _round_up(hidden, LANE)
    c = heads * head_pad
    scale = 1.0 / math.sqrt(hidden)

    def pad_linear(w, b, cin):
        wp = np.zeros((c, c), dtype=np.float32)
        bp = np.zeros((1, c), dtype=np.float32)
        for h in range(heads):
            wp[:cin, h * head_pad:h * head_pad + hidden] = w[:, h * hidden:(h + 1) * hidden]
            bp[0, h * head_pad:h * head_pad + hidden] = b[h * hidden:(h + 1) * hidden]
        return wp, bp

    w_layers, b_layers = [], []
    for l in range(num_layers):
        cin = in_channels if l == 0 else hidden
        bound = 1.0 / math.sqrt(cin)
        key, *ks = jax.random.split(key, 9)
        blocks_w, blocks_b = [], []
        for idx, name in enumerate(("q", "k", "v", "s")):
            kw, kb = ks[2 * idx], ks[2 * idx + 1]
            w = np.asarray(jax.random.uniform(kw, (cin, heads * hidden),
                                              jnp.float32, -bound, bound))
            b = np.asarray(jax.random.uniform(kb, (heads * hidden,),
                                              jnp.float32, -bound, bound))
            if name == "q":                          # fold attention scale into Wq/bq
                w = w * scale
                b = b * scale
            wp, bp = pad_linear(w, b, cin)
            blocks_w.append(wp)
            blocks_b.append(bp)
        w_layers.append(np.concatenate(blocks_w, axis=1))   # (C, 4C)
        b_layers.append(np.concatenate(blocks_b, axis=1))   # (1, 4C)

    w_all = jnp.asarray(np.stack(w_layers)).astype(jnp.bfloat16)  # (L, C, 4C)
    b_all = jnp.asarray(np.stack(b_layers)).astype(jnp.float32)   # (L, 1, 4C)
    return w_all, b_all


# ----------------------------------- main ---------------------------------- #

if __name__ == "__main__":
    key = jax.random.PRNGKey(0)

    num_nodes = 16
    in_channels = 8
    hidden_channels = 32
    num_layers = 2
    heads = 1          # concat=True + in_channels=hidden for i>0 => heads must be 1
    # norm = None      # -> nn.Identity between layers

    kx, kp = jax.random.split(key)
    x = jax.random.normal(kx, (num_nodes, in_channels), jnp.float32)

    # edge_index: (2, E) = [source row; target row]
    edge_index = np.array(
        [[0, 1, 2, 3, 4, 5, 6, 7, 8, 9, 10, 11, 12, 13, 14, 15, 0, 5, 3, 9, 12, 7],
         [1, 2, 3, 4, 5, 6, 7, 8, 9, 10, 11, 12, 13, 14, 15, 0, 8, 1, 11, 2, 6, 14]],
        dtype=np.int32,
    )

    params = init_params(kp, in_channels, hidden_channels, num_layers, heads)

    out = graph_transformer_forward(x, edge_index, params,
                                    hidden=hidden_channels, heads=heads)
    out = jax.block_until_ready(out)

    assert out.shape == (num_nodes, heads * hidden_channels)
    assert out.dtype == jnp.float32
    assert bool(jnp.all(jnp.isfinite(out)))
    print("KERNEL_OK")
</pallas_src>

<mosaic_0001>
module attributes {stable_mosaic.version = 11 : i64} {
  func.func @graph_transformer_kernel(%arg0: memref<16x128xf32, #tpu.memory_space<vmem>>, %arg1: memref<16x16xf32, #tpu.memory_space<vmem>>, %arg2: memref<2x128x512xbf16, #tpu.memory_space<vmem>>, %arg3: memref<2x1x512xf32, #tpu.memory_space<vmem>>, %arg4: memref<16x128xf32, #tpu.memory_space<vmem>>) attributes {dimension_semantics = [], scalar_prefetch = 0 : i64, scratch_operands = 0 : i64, tpu.core_type = #tpu.core_type<tc>} {
    %c0 = arith.constant 0 : index
    %c0_0 = arith.constant 0 : index
    %0 = vector.load %arg0[%c0, %c0_0] : memref<16x128xf32, #tpu.memory_space<vmem>>, vector<16x128xf32>
    %c0_1 = arith.constant 0 : index
    %c0_2 = arith.constant 0 : index
    %1 = vector.load %arg1[%c0_1, %c0_2] : memref<16x16xf32, #tpu.memory_space<vmem>>, vector<16x16xf32>
    %cst = arith.constant 0.000000e+00 : f32
    %2 = vector.broadcast %cst : f32 to vector<16x16xf32>
    %3 = arith.cmpf ogt, %1, %2 : vector<16x16xf32>
    %cst_3 = arith.constant 0.000000e+00 : f32
    %cst_4 = arith.constant -1.000000e+30 : f32
    %4 = vector.broadcast %cst_3 : f32 to vector<16x16xf32>
    %5 = vector.broadcast %cst_4 : f32 to vector<16x16xf32>
    %6 = arith.select %3, %4, %5 : vector<16x16xi1>, vector<16x16xf32>
    %7 = arith.truncf %0 : vector<16x128xf32> to vector<16x128xbf16>
    %c0_5 = arith.constant 0 : index
    %c0_6 = arith.constant 0 : index
    %c0_7 = arith.constant 0 : index
    %8 = vector.load %arg2[%c0_5, %c0_6, %c0_7] : memref<2x128x512xbf16, #tpu.memory_space<vmem>>, vector<1x128x512xbf16>
    %9 = vector.shape_cast %8 : vector<1x128x512xbf16> to vector<128x512xbf16>
    %cst_8 = arith.constant dense<0.000000e+00> : vector<16x512xf32>
    %10 = tpu.matmul %7, %9, %cst_8 {dimension_numbers = #tpu.dot_dimension_numbers<[1], [0], [0], [1], [0, 0, 1, 1], [], []>} : vector<16x128xbf16>, vector<128x512xbf16>, vector<16x512xf32> -> vector<16x512xf32>
    %c0_9 = arith.constant 0 : index
    %c0_10 = arith.constant 0 : index
    %c0_11 = arith.constant 0 : index
    %11 = vector.load %arg3[%c0_9, %c0_10, %c0_11] : memref<2x1x512xf32, #tpu.memory_space<vmem>>, vector<1x1x512xf32>
    %12 = vector.shape_cast %11 : vector<1x1x512xf32> to vector<1x512xf32>
    %13 = vector.broadcast %12 : vector<1x512xf32> to vector<16x512xf32>
    %14 = arith.addf %10, %13 : vector<16x512xf32>
    %15 = vector.extract_strided_slice %14 {offsets = [0, 0], sizes = [16, 128], strides = [1, 1]} : vector<16x512xf32> to vector<16x128xf32>
    %16 = vector.extract_strided_slice %14 {offsets = [0, 128], sizes = [16, 128], strides = [1, 1]} : vector<16x512xf32> to vector<16x128xf32>
    %17 = vector.extract_strided_slice %14 {offsets = [0, 256], sizes = [16, 128], strides = [1, 1]} : vector<16x512xf32> to vector<16x128xf32>
    %18 = vector.extract_strided_slice %14 {offsets = [0, 384], sizes = [16, 128], strides = [1, 1]} : vector<16x512xf32> to vector<16x128xf32>
    %19 = arith.truncf %15 : vector<16x128xf32> to vector<16x128xbf16>
    %20 = arith.truncf %16 : vector<16x128xf32> to vector<16x128xbf16>
    %21 = arith.truncf %17 : vector<16x128xf32> to vector<16x128xbf16>
    %cst_12 = arith.constant dense<0.000000e+00> : vector<16x16xf32>
    %22 = tpu.matmul %19, %20, %cst_12 {dimension_numbers = #tpu.dot_dimension_numbers<[1], [1], [0], [0], [0, 0, 1, 0], [], []>} : vector<16x128xbf16>, vector<16x128xbf16>, vector<16x16xf32> -> vector<16x16xf32>
    %23 = arith.addf %22, %6 : vector<16x16xf32>
    %cst_13 = arith.constant dense<0xFF800000> : vector<16xf32>
    %24 = vector.multi_reduction <maximumf>, %23, %cst_13 [1] : vector<16x16xf32> to vector<16xf32>
    %25 = vector.shape_cast %24 : vector<16xf32> to vector<16x1xf32>
    %26 = vector.broadcast %25 : vector<16x1xf32> to vector<16x16xf32>
    %27 = arith.subf %23, %26 : vector<16x16xf32>
    %28 = math.exp %27 : vector<16x16xf32>
    %29 = arith.mulf %28, %1 : vector<16x16xf32>
    %cst_14 = arith.constant dense<0.000000e+00> : vector<16xf32>
    %30 = vector.multi_reduction <add>, %29, %cst_14 [1] : vector<16x16xf32> to vector<16xf32>
    %31 = vector.shape_cast %30 : vector<16xf32> to vector<16x1xf32>
    %cst_15 = arith.constant 1.000000e-30 : f32
    %32 = vector.broadcast %cst_15 : f32 to vector<16x1xf32>
    %33 = arith.maximumf %31, %32 : vector<16x1xf32>
    %34 = tpu.reciprocal %33 {approx = true} : vector<16x1xf32> -> vector<16x1xf32>
    %35 = vector.broadcast %34 : vector<16x1xf32> to vector<16x16xf32>
    %36 = arith.mulf %29, %35 : vector<16x16xf32>
    %37 = arith.truncf %36 : vector<16x16xf32> to vector<16x16xbf16>
    %cst_16 = arith.constant dense<0.000000e+00> : vector<16x128xf32>
    %38 = tpu.matmul %37, %21, %cst_16 {dimension_numbers = #tpu.dot_dimension_numbers<[1], [0], [0], [1], [0, 0, 1, 1], [], []>} : vector<16x16xbf16>, vector<16x128xbf16>, vector<16x128xf32> -> vector<16x128xf32>
    %39 = arith.addf %38, %18 : vector<16x128xf32>
    %cst_17 = arith.constant 0.000000e+00 : f32
    %40 = vector.broadcast %cst_17 : f32 to vector<16x128xf32>
    %41 = arith.maximumf %39, %40 : vector<16x128xf32>
    %42 = arith.truncf %41 : vector<16x128xf32> to vector<16x128xbf16>
    %c1 = arith.constant 1 : index
    %c0_18 = arith.constant 0 : index
    %c0_19 = arith.constant 0 : index
    %43 = vector.load %arg2[%c1, %c0_18, %c0_19] : memref<2x128x512xbf16, #tpu.memory_space<vmem>>, vector<1x128x512xbf16>
    %44 = vector.shape_cast %43 : vector<1x128x512xbf16> to vector<128x512xbf16>
    %cst_20 = arith.constant dense<0.000000e+00> : vector<16x512xf32>
    %45 = tpu.matmul %42, %44, %cst_20 {dimension_numbers = #tpu.dot_dimension_numbers<[1], [0], [0], [1], [0, 0, 1, 1], [], []>} : vector<16x128xbf16>, vector<128x512xbf16>, vector<16x512xf32> -> vector<16x512xf32>
    %c1_21 = arith.constant 1 : index
    %c0_22 = arith.constant 0 : index
    %c0_23 = arith.constant 0 : index
    %46 = vector.load %arg3[%c1_21, %c0_22, %c0_23] : memref<2x1x512xf32, #tpu.memory_space<vmem>>, vector<1x1x512xf32>
    %47 = vector.shape_cast %46 : vector<1x1x512xf32> to vector<1x512xf32>
    %48 = vector.broadcast %47 : vector<1x512xf32> to vector<16x512xf32>
    %49 = arith.addf %45, %48 : vector<16x512xf32>
    %50 = vector.extract_strided_slice %49 {offsets = [0, 0], sizes = [16, 128], strides = [1, 1]} : vector<16x512xf32> to vector<16x128xf32>
    %51 = vector.extract_strided_slice %49 {offsets = [0, 128], sizes = [16, 128], strides = [1, 1]} : vector<16x512xf32> to vector<16x128xf32>
    %52 = vector.extract_strided_slice %49 {offsets = [0, 256], sizes = [16, 128], strides = [1, 1]} : vector<16x512xf32> to vector<16x128xf32>
    %53 = vector.extract_strided_slice %49 {offsets = [0, 384], sizes = [16, 128], strides = [1, 1]} : vector<16x512xf32> to vector<16x128xf32>
    %54 = arith.truncf %50 : vector<16x128xf32> to vector<16x128xbf16>
    %55 = arith.truncf %51 : vector<16x128xf32> to vector<16x128xbf16>
    %56 = arith.truncf %52 : vector<16x128xf32> to vector<16x128xbf16>
    %cst_24 = arith.constant dense<0.000000e+00> : vector<16x16xf32>
    %57 = tpu.matmul %54, %55, %cst_24 {dimension_numbers = #tpu.dot_dimension_numbers<[1], [1], [0], [0], [0, 0, 1, 0], [], []>} : vector<16x128xbf16>, vector<16x128xbf16>, vector<16x16xf32> -> vector<16x16xf32>
    %58 = arith.addf %57, %6 : vector<16x16xf32>
    %cst_25 = arith.constant dense<0xFF800000> : vector<16xf32>
    %59 = vector.multi_reduction <maximumf>, %58, %cst_25 [1] : vector<16x16xf32> to vector<16xf32>
    %60 = vector.shape_cast %59 : vector<16xf32> to vector<16x1xf32>
    %61 = vector.broadcast %60 : vector<16x1xf32> to vector<16x16xf32>
    %62 = arith.subf %58, %61 : vector<16x16xf32>
    %63 = math.exp %62 : vector<16x16xf32>
    %64 = arith.mulf %63, %1 : vector<16x16xf32>
    %cst_26 = arith.constant dense<0.000000e+00> : vector<16xf32>
    %65 = vector.multi_reduction <add>, %64, %cst_26 [1] : vector<16x16xf32> to vector<16xf32>
    %66 = vector.shape_cast %65 : vector<16xf32> to vector<16x1xf32>
    %cst_27 = arith.constant 1.000000e-30 : f32
    %67 = vector.broadcast %cst_27 : f32 to vector<16x1xf32>
    %68 = arith.maximumf %66, %67 : vector<16x1xf32>
    %69 = tpu.reciprocal %68 {approx = true} : vector<16x1xf32> -> vector<16x1xf32>
    %70 = vector.broadcast %69 : vector<16x1xf32> to vector<16x16xf32>
    %71 = arith.mulf %64, %70 : vector<16x16xf32>
    %72 = arith.truncf %71 : vector<16x16xf32> to vector<16x16xbf16>
    %cst_28 = arith.constant dense<0.000000e+00> : vector<16x128xf32>
    %73 = tpu.matmul %72, %56, %cst_28 {dimension_numbers = #tpu.dot_dimension_numbers<[1], [0], [0], [1], [0, 0, 1, 1], [], []>} : vector<16x16xbf16>, vector<16x128xbf16>, vector<16x128xf32> -> vector<16x128xf32>
    %74 = arith.addf %73, %53 : vector<16x128xf32>
    %c0_29 = arith.constant 0 : index
    %c0_30 = arith.constant 0 : index
    %75 = vector.load %arg4[%c0_29, %c0_30] : memref<16x128xf32, #tpu.memory_space<vmem>>, vector<16x128xf32>
    tpu.vector_store %arg4[%c0_29, %c0_30], %74 {strides = array<i32>} : memref<16x128xf32, #tpu.memory_space<vmem>>, vector<16x128xf32>,
    return
  }
}

</mosaic_0001>

<llo_original>
// kernel: tpu_custom_call.1
$region0: #{tpu_custom_call.1}
  #allocation0 [shape = 'u32[]', space=smem, size = 0x4, offset = 0x4, fixed_abs, tag = 'smem constant byte address 0x4 - core index']
  #allocation1 [shape = 'u32[144,128]{1,0:T(1,128)}', space=vmem, size = 0x12000, scoped, tag = 'internal scratch']
  %s0 = inlined_call_operand.hbm [shape: f32[16,128], index: 0, kind: input, shape index: {}]
  %s1 = inlined_call_operand.hbm [shape: f32[16,16], index: 1, kind: input, shape index: {}]
  %s2 = inlined_call_operand.hbm [shape: bf16[2,128,512], index: 2, kind: input, shape index: {}]
  %s3 = inlined_call_operand.vmem [shape: f32[2,1,512], index: 3, kind: input, shape index: {}]
  %s4 = inlined_call_operand.hbm [shape: f32[16,128], index: 4, kind: output, shape index: {}]
  %s5 = sld [smem:[#allocation0]]
  $region38: #{tpu_custom_call.1} parent=0
    _
  %s7 = ssub.s32 1, %s5
  %s8 = scalar_select 0, %s7, %s5
  $region1: #{tpu_custom_call.1} parent=0
    #allocation2 [shape = 'u8[8192]{0}', space=vmem, size = 0x2000, scoped, tag = 'input window, operand 0, single buffered']
    #allocation3 [shape = 's32[1]{0}', space=sflag, size = 0x4, scoped, tag = 'scoped memory for tpu_custom_call.1']
    #allocation4 [shape = 's32[1]{0}', space=sflag, size = 0x4, scoped, tag = 'scoped memory for tpu_custom_call.1']
    #allocation5 [shape = 'u8[8192]{0}', space=vmem, size = 0x2000, scoped, tag = 'input window, operand 1, single buffered']
    #allocation6 [shape = 's32[1]{0}', space=sflag, size = 0x4, scoped, tag = 'scoped memory for tpu_custom_call.1']
    #allocation7 [shape = 'u8[262144]{0}', space=vmem, size = 0x40000, scoped, tag = 'input window, operand 2, single buffered']
    #allocation8 [shape = 'u8[8192]{0}', space=vmem, size = 0x2000, scoped, tag = 'output window, operand 0, single buffered']
    %9 = vsyncpa [#allocation3], 0
    %10 = vsyncpa [#allocation6], 0
    %11 = vsyncpa [#allocation4], 0
    // Predicated region
    $region2: #{tpu_custom_call.1} parent=1 // pred_check
      _
    $region3: #{tpu_custom_call.1} parent=1 // pred_check_branch
      %13 = sbr.rel (0) target = $region5
    $region4: #{tpu_custom_call.1} parent=1 // pred_region
      %s15 = ssub.s32 256, 256
      %16 = vsyncadd [#allocation3], %s15
      %s17 = sshll.u32 [#allocation2], 4
      %s18 = int_to_ptr.vmem [resolvable:$true] %s17
      %23 = dma.hbm_to_vmem [thread:$0]  %s0, 256, %s18, [#allocation3], 128, 128, 8
    $region5: #{tpu_custom_call.1} parent=1 // pred_fallthru
      _
    // Predicated region
    $region6: #{tpu_custom_call.1} parent=1 // pred_check
      _
    $region7: #{tpu_custom_call.1} parent=1 // pred_check_branch
      %25 = sbr.rel (0) target = $region9
    $region8: #{tpu_custom_call.1} parent=1 // pred_region
      %s27 = ssub.s32 256, 256
      %28 = vsyncadd [#allocation6], %s27
      %s29 = sshll.u32 [#allocation5], 4
      %s30 = int_to_ptr.vmem [resolvable:$true] %s29
      %35 = dma.hbm_to_vmem [thread:$0]  %s1, 256, %s30, [#allocation6], 128, 128, 8
    $region9: #{tpu_custom_call.1} parent=1 // pred_fallthru
      _
    // Predicated region
    $region10: #{tpu_custom_call.1} parent=1 // pred_check
      _
    $region11: #{tpu_custom_call.1} parent=1 // pred_check_branch
      %37 = sbr.rel (0) target = $region13
    $region12: #{tpu_custom_call.1} parent=1 // pred_region
      %s39 = ssub.s32 8192, 8192
      %40 = vsyncadd [#allocation6], %s39
      %s41 = sshll.u32 [#allocation7], 4
      %s42 = int_to_ptr.vmem [resolvable:$true] %s41
      %47 = dma.hbm_to_vmem [thread:$0]  %s2, 8192, %s42, [#allocation6], 256, 256, 16
    $region13: #{tpu_custom_call.1} parent=1 // pred_fallthru
      _
    // Predicated region
    $region14: #{tpu_custom_call.1} parent=1 // pred_check
      _
    $region15: #{tpu_custom_call.1} parent=1 // pred_check_branch
      %49 = sbr.rel (0) target = $region17
    $region16: #{tpu_custom_call.1} parent=1 // pred_region
      _
    $region17: #{tpu_custom_call.1} parent=1 // pred_fallthru
      _
    // Predicated region
    $region18: #{tpu_custom_call.1} parent=1 // pred_check
      _
    $region19: #{tpu_custom_call.1} parent=1 // pred_check_branch
      %51 = sbr.rel (0) target = $region21
    $region20: #{tpu_custom_call.1} parent=1 // pred_region
      %52 = dma.done [#allocation3], 256
    $region21: #{tpu_custom_call.1} parent=1 // pred_fallthru
      _
    // Predicated region
    $region22: #{tpu_custom_call.1} parent=1 // pred_check
      _
    $region23: #{tpu_custom_call.1} parent=1 // pred_check_branch
      %54 = sbr.rel (0) target = $region25
    $region24: #{tpu_custom_call.1} parent=1 // pred_region
      %55 = dma.done [#allocation6], 256
    $region25: #{tpu_custom_call.1} parent=1 // pred_fallthru
      _
    // Predicated region
    $region26: #{tpu_custom_call.1} parent=1 // pred_check
      _
    $region27: #{tpu_custom_call.1} parent=1 // pred_check_branch
      %57 = sbr.rel (0) target = $region29
    $region28: #{tpu_custom_call.1} parent=1 // pred_region
      %58 = dma.done [#allocation6], 8192
    $region29: #{tpu_custom_call.1} parent=1 // pred_fallthru
      _
    %v60 = vld [vmem:[#allocation2] sm:$0xff]
    %v61 = vld [vmem:[#allocation2 + $0x8] sm:$0xff]
    %v62 = vld [vmem:[#allocation5] sm:$0xff]
    %v63 = vld [vmem:[#allocation5 + $0x8] sm:$0xff]
    %vm64 = vcmp.gt.f32.partialorder %v62, 0.0
    %vm65 = vcmp.gt.f32.partialorder %v63, 0.0
    %v66 = vsel %vm64, 0.0, -1e+30
    %v67 = vsel %vm65, 0.0, -1e+30
    %v68 = vpack.c.bf16 %v61, %v60
    %v69 = vld [vmem:[#allocation7] sm:$0xff]
    %v70 = vld [vmem:[#allocation7 + $0x8] sm:$0xff]
    %v71 = vld [vmem:[#allocation7 + $0x10] sm:$0xff]
    %v72 = vld [vmem:[#allocation7 + $0x18] sm:$0xff]
    %v73 = vld [vmem:[#allocation7 + $0x20] sm:$0xff]
    %v74 = vld [vmem:[#allocation7 + $0x28] sm:$0xff]
    %v75 = vld [vmem:[#allocation7 + $0x30] sm:$0xff]
    %v76 = vld [vmem:[#allocation7 + $0x38] sm:$0xff]
    %v77 = vld [vmem:[#allocation7 + $0x40] sm:$0xff]
    %v78 = vld [vmem:[#allocation7 + $0x48] sm:$0xff]
    %v79 = vld [vmem:[#allocation7 + $0x50] sm:$0xff]
    %v80 = vld [vmem:[#allocation7 + $0x58] sm:$0xff]
    %v81 = vld [vmem:[#allocation7 + $0x60] sm:$0xff]
    %v82 = vld [vmem:[#allocation7 + $0x68] sm:$0xff]
    %v83 = vld [vmem:[#allocation7 + $0x70] sm:$0xff]
    %v84 = vld [vmem:[#allocation7 + $0x78] sm:$0xff]
    %v85 = vld [vmem:[#allocation7 + $0x80] sm:$0xff]
    %v86 = vld [vmem:[#allocation7 + $0x88] sm:$0xff]
    %v87 = vld [vmem:[#allocation7 + $0x90] sm:$0xff]
    %v88 = vld [vmem:[#allocation7 + $0x98] sm:$0xff]
    %v89 = vld [vmem:[#allocation7 + $0xa0] sm:$0xff]
    %v90 = vld [vmem:[#allocation7 + $0xa8] sm:$0xff]
    %v91 = vld [vmem:[#allocation7 + $0xb0] sm:$0xff]
    %v92 = vld [vmem:[#allocation7 + $0xb8] sm:$0xff]
    %v93 = vld [vmem:[#allocation7 + $0xc0] sm:$0xff]
    %v94 = vld [vmem:[#allocation7 + $0xc8] sm:$0xff]
    %v95 = vld [vmem:[#allocation7 + $0xd0] sm:$0xff]
    %v96 = vld [vmem:[#allocation7 + $0xd8] sm:$0xff]
    %v97 = vld [vmem:[#allocation7 + $0xe0] sm:$0xff]
    %v98 = vld [vmem:[#allocation7 + $0xe8] sm:$0xff]
    %v99 = vld [vmem:[#allocation7 + $0xf0] sm:$0xff]
    %v100 = vld [vmem:[#allocation7 + $0xf8] sm:$0xff]
    %v101 = vld [vmem:[%s3] sm:$0xf]
    %v103 = vlaneseq
    %v104 = vshrl.u32 %v103, 7
    %v105 = vsub.s32 0, %v104
    %v106 = vrot.slane %v101, %v105
    %v107 = vlaneseq
    %v108 = vshrl.u32 %v107, 7
    %v109 = vsub.s32 1, %v108
    %v110 = vrot.slane %v101, %v109
    %v111 = vlaneseq
    %v112 = vshrl.u32 %v111, 7
    %v113 = vsub.s32 2, %v112
    %v114 = vrot.slane %v101, %v113
    %v115 = vlaneseq
    %v116 = vshrl.u32 %v115, 7
    %v117 = vsub.s32 3, %v116
    %v118 = vrot.slane %v101, %v117
    %v155 = vunpack.c.l.b16 %v69
    %v156 = vunpack.c.h.b16 %v69
    %v157 = vunpack.c.l.b16 %v70
    %v158 = vunpack.c.h.b16 %v70
    %v159 = vunpack.c.l.b16 %v71
    %v160 = vunpack.c.h.b16 %v71
    %v161 = vunpack.c.l.b16 %v72
    %v162 = vunpack.c.h.b16 %v72
    %v163 = vunpack.c.l.b16 %v73
    %v164 = vunpack.c.h.b16 %v73
    %v165 = vunpack.c.l.b16 %v74
    %v166 = vunpack.c.h.b16 %v74
    %v167 = vunpack.c.l.b16 %v75
    %v168 = vunpack.c.h.b16 %v75
    %v169 = vunpack.c.l.b16 %v76
    %v170 = vunpack.c.h.b16 %v76
    %v171 = vunpack.c.l.b16 %v77
    %v172 = vunpack.c.h.b16 %v77
    %v173 = vunpack.c.l.b16 %v78
    %v174 = vunpack.c.h.b16 %v78
    %v175 = vunpack.c.l.b16 %v79
    %v176 = vunpack.c.h.b16 %v79
    %v177 = vunpack.c.l.b16 %v80
    %v178 = vunpack.c.h.b16 %v80
    %v179 = vunpack.c.l.b16 %v81
    %v180 = vunpack.c.h.b16 %v81
    %v181 = vunpack.c.l.b16 %v82
    %v182 = vunpack.c.h.b16 %v82
    %v183 = vunpack.c.l.b16 %v83
    %v184 = vunpack.c.h.b16 %v83
    %v185 = vunpack.c.l.b16 %v84
    %v186 = vunpack.c.h.b16 %v84
    %v187 = vunpack.c.l.b16 %v85
    %v188 = vunpack.c.h.b16 %v85
    %v189 = vunpack.c.l.b16 %v86
    %v190 = vunpack.c.h.b16 %v86
    %v191 = vunpack.c.l.b16 %v87
    %v192 = vunpack.c.h.b16 %v87
    %v193 = vunpack.c.l.b16 %v88
    %v194 = vunpack.c.h.b16 %v88
    %v195 = vunpack.c.l.b16 %v89
    %v196 = vunpack.c.h.b16 %v89
    %v197 = vunpack.c.l.b16 %v90
    %v198 = vunpack.c.h.b16 %v90
    %v199 = vunpack.c.l.b16 %v91
    %v200 = vunpack.c.h.b16 %v91
    %v201 = vunpack.c.l.b16 %v92
    %v202 = vunpack.c.h.b16 %v92
    %v203 = vunpack.c.l.b16 %v93
    %v204 = vunpack.c.h.b16 %v93
    %v205 = vunpack.c.l.b16 %v94
    %v206 = vunpack.c.h.b16 %v94
    %v207 = vunpack.c.l.b16 %v95
    %v208 = vunpack.c.h.b16 %v95
    %v209 = vunpack.c.l.b16 %v96
    %v210 = vunpack.c.h.b16 %v96
    %v211 = vunpack.c.l.b16 %v97
    %v212 = vunpack.c.h.b16 %v97
    %v213 = vunpack.c.l.b16 %v98
    %v214 = vunpack.c.h.b16 %v98
    %v215 = vunpack.c.l.b16 %v99
    %v216 = vunpack.c.h.b16 %v99
    %v217 = vunpack.c.l.b16 %v100
    %v218 = vunpack.c.h.b16 %v100
    %v219 = vpack.c.b16 %v159, %v155
    %v220 = vpack.c.b16 %v160, %v156
    %v221 = vpack.c.b16 %v161, %v157
    %v222 = vpack.c.b16 %v162, %v158
    %v223 = vpack.c.b16 %v167, %v163
    %v224 = vpack.c.b16 %v168, %v164
    %v225 = vpack.c.b16 %v169, %v165
    %v226 = vpack.c.b16 %v170, %v166
    %v227 = vpack.c.b16 %v175, %v171
    %v228 = vpack.c.b16 %v176, %v172
    %v229 = vpack.c.b16 %v177, %v173
    %v230 = vpack.c.b16 %v178, %v174
    %v231 = vpack.c.b16 %v183, %v179
    %v232 = vpack.c.b16 %v184, %v180
    %v233 = vpack.c.b16 %v185, %v181
    %v234 = vpack.c.b16 %v186, %v182
    %v235 = vpack.c.b16 %v191, %v187
    %v236 = vpack.c.b16 %v192, %v188
    %v237 = vpack.c.b16 %v193, %v189
    %v238 = vpack.c.b16 %v194, %v190
    %v239 = vpack.c.b16 %v199, %v195
    %v240 = vpack.c.b16 %v200, %v196
    %v241 = vpack.c.b16 %v201, %v197
    %v242 = vpack.c.b16 %v202, %v198
    %v243 = vpack.c.b16 %v207, %v203
    %v244 = vpack.c.b16 %v208, %v204
    %v245 = vpack.c.b16 %v209, %v205
    %v246 = vpack.c.b16 %v210, %v206
    %v247 = vpack.c.b16 %v215, %v211
    %v248 = vpack.c.b16 %v216, %v212
    %v249 = vpack.c.b16 %v217, %v213
    %v250 = vpack.c.b16 %v218, %v214
    %283 = vmatprep.subr.bf16.mxu0 %v220
    %284 = vmatpush1.bf16.msra.mxu0 %v219
    %285 = vmatprep.subr.bf16.mxu0 %v224
    %286 = vmatpush1.bf16.msra.mxu0 %v223
    %287 = vmatprep.subr.bf16.mxu0 %v228
    %288 = vmatpush1.bf16.msra.mxu0 %v227
    %289 = vmatprep.subr.bf16.mxu0 %v232
    %290 = vmatpush1.bf16.msra.mxu0 %v231
    %291 = vmatprep.subr.bf16.mxu0 %v236
    %292 = vmatpush1.bf16.msra.mxu0 %v235
    %293 = vmatprep.subr.bf16.mxu0 %v240
    %294 = vmatpush1.bf16.msra.mxu0 %v239
    %295 = vmatprep.subr.bf16.mxu0 %v244
    %296 = vmatpush1.bf16.msra.mxu0 %v243
    %297 = vmatprep.subr.bf16.mxu0 %v248
    %298 = vmatpush1.bf16.msra.mxu0 %v247
    %299 = vmatprep.subr.bf16.mxu0 0
    %300 = vmatpush1.bf16.msra.mxu0 0
    %301 = vmatprep.subr.bf16.mxu0 0
    %302 = vmatpush1.bf16.msra.mxu0 0
    %303 = vmatprep.subr.bf16.mxu0 0
    %304 = vmatpush1.bf16.msra.mxu0 0
    %305 = vmatprep.subr.bf16.mxu0 0
    %306 = vmatpush1.bf16.msra.mxu0 0
    %307 = vmatprep.subr.bf16.mxu0 0
    %308 = vmatpush1.bf16.msra.mxu0 0
    %309 = vmatprep.subr.bf16.mxu0 0
    %310 = vmatpush1.bf16.msra.mxu0 0
    %311 = vmatprep.subr.bf16.mxu0 0
    %312 = vmatpush1.bf16.msra.mxu0 0
    %313 = vmatprep.subr.bf16.mxu0 0
    %314 = vmatpush1.bf16.msra.mxu0 0
    %315 = vmatprep.mubr.bf16.mxu0 0
    %316 = vmatmul.mubr.bf16.gmra.mrb[0].mxu0 %v68
    %v317 = vpop.f32.mrb[0].mxu0
    %v318 = vadd.f32 %v106, %v317
    %v319 = vpop.f32.mrb[0].mxu0
    %v320 = vadd.f32 %v110, %v319
    %v321 = vpop.f32.mrb[0].mxu0
    %v322 = vadd.f32 %v106, %v321
    %v323 = vpop.f32.mrb[0].mxu0
    %v324 = vadd.f32 %v110, %v323
    %325 = vdwg.mxu0
    %326 = vmatprep.subr.bf16.mxu0 %v222
    %327 = vmatpush1.bf16.msra.mxu0 %v221
    %328 = vmatprep.subr.bf16.mxu0 %v226
    %329 = vmatpush1.bf16.msra.mxu0 %v225
    %330 = vmatprep.subr.bf16.mxu0 %v230
    %331 = vmatpush1.bf16.msra.mxu0 %v229
    %332 = vmatprep.subr.bf16.mxu0 %v234
    %333 = vmatpush1.bf16.msra.mxu0 %v233
    %334 = vmatprep.subr.bf16.mxu0 %v238
    %335 = vmatpush1.bf16.msra.mxu0 %v237
    %336 = vmatprep.subr.bf16.mxu0 %v242
    %337 = vmatpush1.bf16.msra.mxu0 %v241
    %338 = vmatprep.subr.bf16.mxu0 %v246
    %339 = vmatpush1.bf16.msra.mxu0 %v245
    %340 = vmatprep.subr.bf16.mxu0 %v250
    %341 = vmatpush1.bf16.msra.mxu0 %v249
    %342 = vmatprep.subr.bf16.mxu0 0
    %343 = vmatpush1.bf16.msra.mxu0 0
    %344 = vmatprep.subr.bf16.mxu0 0
    %345 = vmatpush1.bf16.msra.mxu0 0
    %346 = vmatprep.subr.bf16.mxu0 0
    %347 = vmatpush1.bf16.msra.mxu0 0
    %348 = vmatprep.subr.bf16.mxu0 0
    %349 = vmatpush1.bf16.msra.mxu0 0
    %350 = vmatprep.subr.bf16.mxu0 0
    %351 = vmatpush1.bf16.msra.mxu0 0
    %352 = vmatprep.subr.bf16.mxu0 0
    %353 = vmatpush1.bf16.msra.mxu0 0
    %354 = vmatprep.subr.bf16.mxu0 0
    %355 = vmatpush1.bf16.msra.mxu0 0
    %356 = vmatprep.subr.bf16.mxu0 0
    %357 = vmatpush1.bf16.msra.mxu0 0
    %358 = vmatprep.mubr.bf16.mxu0 0
    %359 = vmatmul.mubr.bf16.gmra.mrb[0].mxu0 %v68
    %v360 = vpop.f32.mrb[0].mxu0
    %v361 = vadd.f32 %v114, %v360
    %v362 = vpop.f32.mrb[0].mxu0
    %v363 = vadd.f32 %v118, %v362
    %v364 = vpop.f32.mrb[0].mxu0
    %v365 = vadd.f32 %v114, %v364
    %v366 = vpop.f32.mrb[0].mxu0
    %v367 = vadd.f32 %v118, %v366
    %368 = vdwg.mxu0
    %v369 = vpack.c.bf16 %v322, %v318
    %v370 = vpack.c.bf16 %v324, %v320
    %v371 = vpack.c.bf16 %v365, %v361
    %372 = vmatprep.subr.bf16.mxu0 0
    %373 = vmatpush1.bf16.xpose.msra.mxu0 %v370
    %374 = vmatprep.subr.bf16.mxu0 0
    %375 = vmatpush1.bf16.xpose.msra.mxu0 0
    %376 = vmatprep.subr.bf16.mxu0 0
    %377 = vmatpush1.bf16.xpose.msra.mxu0 0
    %378 = vmatprep.subr.bf16.mxu0 0
    %379 = vmatpush1.bf16.xpose.msra.mxu0 0
    %380 = vmatprep.subr.bf16.mxu0 0
    %381 = vmatpush1.bf16.xpose.msra.mxu0 0
    %382 = vmatprep.subr.bf16.mxu0 0
    %383 = vmatpush1.bf16.xpose.msra.mxu0 0
    %384 = vmatprep.subr.bf16.mxu0 0
    %385 = vmatpush1.bf16.xpose.msra.mxu0 0
    %386 = vmatprep.subr.bf16.mxu0 0
    %387 = vmatpush1.bf16.xpose.msra.mxu0 0
    %388 = vmatprep.subr.bf16.mxu0 0
    %389 = vmatpush1.bf16.xpose.msra.mxu0 0
    %390 = vmatprep.subr.bf16.mxu0 0
    %391 = vmatpush1.bf16.xpose.msra.mxu0 0
    %392 = vmatprep.subr.bf16.mxu0 0
    %393 = vmatpush1.bf16.xpose.msra.mxu0 0
    %394 = vmatprep.subr.bf16.mxu0 0
    %395 = vmatpush1.bf16.xpose.msra.mxu0 0
    %396 = vmatprep.subr.bf16.mxu0 0
    %397 = vmatpush1.bf16.xpose.msra.mxu0 0
    %398 = vmatprep.subr.bf16.mxu0 0
    %399 = vmatpush1.bf16.xpose.msra.mxu0 0
    %400 = vmatprep.subr.bf16.mxu0 0
    %401 = vmatpush1.bf16.xpose.msra.mxu0 0
    %402 = vmatprep.subr.bf16.mxu0 0
    %403 = vmatpush1.bf16.xpose.msra.mxu0 0
    %404 = vmatprep.mubr.bf16.mxu0 0
    %405 = vmatmul.mubr.bf16.gmra.mrb[0].mxu0 %v369
    %v406 = vpop.f32.mrb[0].mxu0
    %v407 = vadd.f32 %v66, %v406
    %v408 = vpop.f32.mrb[0].mxu0
    %v409 = vpop.f32.mrb[0].mxu0
    %v410 = vadd.f32 %v67, %v409
    %v411 = vpop.f32.mrb[0].mxu0
    %412 = vdwg.mxu0
    %vm413 = vcmask 130048
    %v414 = vsel %vm413, %v407, -inf
    %415 = vmax.xlane.f32.xlu0 %v414
    %v416 = vpop.xlane.xlu0 %415
    %v417 = vsel %vm413, %v410, -inf
    %418 = vmax.xlane.f32.xlu0 %v417
    %v419 = vpop.xlane.xlu0 %418
    %v420 = vsub.f32 %v407, %v416
    %v421 = vsub.f32 %v410, %v419
    %v422 = vmul.f32 %v420, 1.442695
    %v423 = vpow.pop %v422
    %v424 = vmul.f32 %v421, 1.442695
    %v425 = vpow.pop %v424
    %v426 = vmul.f32 %v423, %v62
    %v427 = vmul.f32 %v425, %v63
    %v428 = vsel %vm413, %v426, 0.0
    %429 = vadd.xlane.f32.xlu0 %v428
    %v430 = vpop.xlane.xlu0 %429
    %v431 = vsel %vm413, %v427, 0.0
    %432 = vadd.xlane.f32.xlu0 %v431
    %v433 = vpop.xlane.xlu0 %432
    %v434 = vmax.f32 %v430, 1e-30
    %v435 = vmax.f32 %v433, 1e-30
    %v436 = vrcp.pop %v434
    %v437 = vrcp.pop %v435
    %v438 = vmul.f32 %v426, %v436
    %v439 = vmul.f32 %v427, %v437
    %v440 = vpack.c.bf16 %v439, %v438
    %v442 = vsel %vm413, %v440, 0
    %444 = vmatprep.subr.bf16.mxu0 0
    %445 = vmatpush1.bf16.msra.mxu0 %v371
    %446 = vmatprep.subr.bf16.mxu0 0
    %447 = vmatpush1.bf16.msra.mxu0 0
    %448 = vmatprep.subr.bf16.mxu0 0
    %449 = vmatpush1.bf16.msra.mxu0 0
    %450 = vmatprep.subr.bf16.mxu0 0
    %451 = vmatpush1.bf16.msra.mxu0 0
    %452 = vmatprep.subr.bf16.mxu0 0
    %453 = vmatpush1.bf16.msra.mxu0 0
    %454 = vmatprep.subr.bf16.mxu0 0
    %455 = vmatpush1.bf16.msra.mxu0 0
    %456 = vmatprep.subr.bf16.mxu0 0
    %457 = vmatpush1.bf16.msra.mxu0 0
    %458 = vmatprep.subr.bf16.mxu0 0
    %459 = vmatpush1.bf16.msra.mxu0 0
    %460 = vmatprep.subr.bf16.mxu0 0
    %461 = vmatpush1.bf16.msra.mxu0 0
    %462 = vmatprep.subr.bf16.mxu0 0
    %463 = vmatpush1.bf16.msra.mxu0 0
    %464 = vmatprep.subr.bf16.mxu0 0
    %465 = vmatpush1.bf16.msra.mxu0 0
    %466 = vmatprep.subr.bf16.mxu0 0
    %467 = vmatpush1.bf16.msra.mxu0 0
    %468 = vmatprep.subr.bf16.mxu0 0
    %469 = vmatpush1.bf16.msra.mxu0 0
    %470 = vmatprep.subr.bf16.mxu0 0
    %471 = vmatpush1.bf16.msra.mxu0 0
    %472 = vmatprep.subr.bf16.mxu0 0
    %473 = vmatpush1.bf16.msra.mxu0 0
    %474 = vmatprep.subr.bf16.mxu0 0
    %475 = vmatpush1.bf16.msra.mxu0 0
    %476 = vmatprep.mubr.bf16.mxu0 0
    %477 = vmatmul.mubr.bf16.gmra.mrb[0].mxu0 %v442
    %v478 = vpop.f32.mrb[0].mxu0
    %v479 = vadd.f32 %v363, %v478
    %v480 = vpop.f32.mrb[0].mxu0
    %v481 = vpop.f32.mrb[0].mxu0
    %v482 = vadd.f32 %v367, %v481
    %v483 = vpop.f32.mrb[0].mxu0
    %484 = vdwg.mxu0
    %v485 = vmax.f32 %v479, 0.0
    %v486 = vmax.f32 %v482, 0.0
    %v487 = vpack.c.bf16 %v486, %v485
    %s488 = scalar_lea.vmem [#allocation7], 256
    %v489 = vld [vmem:[%s488] sm:$0xff]
    %v490 = vld [vmem:[%s488 + $0x8] sm:$0xff]
    %v491 = vld [vmem:[%s488 + $0x10] sm:$0xff]
    %v492 = vld [vmem:[%s488 + $0x18] sm:$0xff]
    %v493 = vld [vmem:[%s488 + $0x20] sm:$0xff]
    %v494 = vld [vmem:[%s488 + $0x28] sm:$0xff]
    %v495 = vld [vmem:[%s488 + $0x30] sm:$0xff]
    %v496 = vld [vmem:[%s488 + $0x38] sm:$0xff]
    %v497 = vld [vmem:[%s488 + $0x40] sm:$0xff]
    %v498 = vld [vmem:[%s488 + $0x48] sm:$0xff]
    %v499 = vld [vmem:[%s488 + $0x50] sm:$0xff]
    %v500 = vld [vmem:[%s488 + $0x58] sm:$0xff]
    %v501 = vld [vmem:[%s488 + $0x60] sm:$0xff]
    %v502 = vld [vmem:[%s488 + $0x68] sm:$0xff]
    %v503 = vld [vmem:[%s488 + $0x70] sm:$0xff]
    %v504 = vld [vmem:[%s488 + $0x78] sm:$0xff]
    %v505 = vld [vmem:[%s488 + $0x80] sm:$0xff]
    %v506 = vld [vmem:[%s488 + $0x88] sm:$0xff]
    %v507 = vld [vmem:[%s488 + $0x90] sm:$0xff]
    %v508 = vld [vmem:[%s488 + $0x98] sm:$0xff]
    %v509 = vld [vmem:[%s488 + $0xa0] sm:$0xff]
    %v510 = vld [vmem:[%s488 + $0xa8] sm:$0xff]
    %v511 = vld [vmem:[%s488 + $0xb0] sm:$0xff]
    %v512 = vld [vmem:[%s488 + $0xb8] sm:$0xff]
    %v513 = vld [vmem:[%s488 + $0xc0] sm:$0xff]
    %v514 = vld [vmem:[%s488 + $0xc8] sm:$0xff]
    %v515 = vld [vmem:[%s488 + $0xd0] sm:$0xff]
    %v516 = vld [vmem:[%s488 + $0xd8] sm:$0xff]
    %v517 = vld [vmem:[%s488 + $0xe0] sm:$0xff]
    %v518 = vld [vmem:[%s488 + $0xe8] sm:$0xff]
    %v519 = vld [vmem:[%s488 + $0xf0] sm:$0xff]
    %v520 = vld [vmem:[%s488 + $0xf8] sm:$0xff]
    %s521 = scalar_lea.vmem %s3, 4
    %v522 = vld [vmem:[%s521] sm:$0xf]
    %v524 = vlaneseq
    %v525 = vshrl.u32 %v524, 7
    %v526 = vsub.s32 0, %v525
    %v527 = vrot.slane %v522, %v526
    %v528 = vlaneseq
    %v529 = vshrl.u32 %v528, 7
    %v530 = vsub.s32 1, %v529
    %v531 = vrot.slane %v522, %v530
    %v532 = vlaneseq
    %v533 = vshrl.u32 %v532, 7
    %v534 = vsub.s32 2, %v533
    %v535 = vrot.slane %v522, %v534
    %v536 = vlaneseq
    %v537 = vshrl.u32 %v536, 7
    %v538 = vsub.s32 3, %v537
    %v539 = vrot.slane %v522, %v538
    %v576 = vunpack.c.l.b16 %v489
    %v577 = vunpack.c.h.b16 %v489
    %v578 = vunpack.c.l.b16 %v490
    %v579 = vunpack.c.h.b16 %v490
    %v580 = vunpack.c.l.b16 %v491
    %v581 = vunpack.c.h.b16 %v491
    %v582 = vunpack.c.l.b16 %v492
    %v583 = vunpack.c.h.b16 %v492
    %v584 = vunpack.c.l.b16 %v493
    %v585 = vunpack.c.h.b16 %v493
    %v586 = vunpack.c.l.b16 %v494
    %v587 = vunpack.c.h.b16 %v494
    %v588 = vunpack.c.l.b16 %v495
    %v589 = vunpack.c.h.b16 %v495
    %v590 = vunpack.c.l.b16 %v496
    %v591 = vunpack.c.h.b16 %v496
    %v592 = vunpack.c.l.b16 %v497
    %v593 = vunpack.c.h.b16 %v497
    %v594 = vunpack.c.l.b16 %v498
    %v595 = vunpack.c.h.b16 %v498
    %v596 = vunpack.c.l.b16 %v499
    %v597 = vunpack.c.h.b16 %v499
    %v598 = vunpack.c.l.b16 %v500
    %v599 = vunpack.c.h.b16 %v500
    %v600 = vunpack.c.l.b16 %v501
    %v601 = vunpack.c.h.b16 %v501
    %v602 = vunpack.c.l.b16 %v502
    %v603 = vunpack.c.h.b16 %v502
    %v604 = vunpack.c.l.b16 %v503
    %v605 = vunpack.c.h.b16 %v503
    %v606 = vunpack.c.l.b16 %v504
    %v607 = vunpack.c.h.b16 %v504
    %v608 = vunpack.c.l.b16 %v505
    %v609 = vunpack.c.h.b16 %v505
    %v610 = vunpack.c.l.b16 %v506
    %v611 = vunpack.c.h.b16 %v506
    %v612 = vunpack.c.l.b16 %v507
    %v613 = vunpack.c.h.b16 %v507
    %v614 = vunpack.c.l.b16 %v508
    %v615 = vunpack.c.h.b16 %v508
    %v616 = vunpack.c.l.b16 %v509
    %v617 = vunpack.c.h.b16 %v509
    %v618 = vunpack.c.l.b16 %v510
    %v619 = vunpack.c.h.b16 %v510
    %v620 = vunpack.c.l.b16 %v511
    %v621 = vunpack.c.h.b16 %v511
    %v622 = vunpack.c.l.b16 %v512
    %v623 = vunpack.c.h.b16 %v512
    %v624 = vunpack.c.l.b16 %v513
    %v625 = vunpack.c.h.b16 %v513
    %v626 = vunpack.c.l.b16 %v514
    %v627 = vunpack.c.h.b16 %v514
    %v628 = vunpack.c.l.b16 %v515
    %v629 = vunpack.c.h.b16 %v515
    %v630 = vunpack.c.l.b16 %v516
    %v631 = vunpack.c.h.b16 %v516
    %v632 = vunpack.c.l.b16 %v517
    %v633 = vunpack.c.h.b16 %v517
    %v634 = vunpack.c.l.b16 %v518
    %v635 = vunpack.c.h.b16 %v518
    %v636 = vunpack.c.l.b16 %v519
    %v637 = vunpack.c.h.b16 %v519
    %v638 = vunpack.c.l.b16 %v520
    %v639 = vunpack.c.h.b16 %v520
    %v640 = vpack.c.b16 %v580, %v576
    %v641 = vpack.c.b16 %v581, %v577
    %v642 = vpack.c.b16 %v582, %v578
    %v643 = vpack.c.b16 %v583, %v579
    %v644 = vpack.c.b16 %v588, %v584
    %v645 = vpack.c.b16 %v589, %v585
    %v646 = vpack.c.b16 %v590, %v586
    %v647 = vpack.c.b16 %v591, %v587
    %v648 = vpack.c.b16 %v596, %v592
    %v649 = vpack.c.b16 %v597, %v593
    %v650 = vpack.c.b16 %v598, %v594
    %v651 = vpack.c.b16 %v599, %v595
    %v652 = vpack.c.b16 %v604, %v600
    %v653 = vpack.c.b16 %v605, %v601
    %v654 = vpack.c.b16 %v606, %v602
    %v655 = vpack.c.b16 %v607, %v603
    %v656 = vpack.c.b16 %v612, %v608
    %v657 = vpack.c.b16 %v613, %v609
    %v658 = vpack.c.b16 %v614, %v610
    %v659 = vpack.c.b16 %v615, %v611
    %v660 = vpack.c.b16 %v620, %v616
    %v661 = vpack.c.b16 %v621, %v617
    %v662 = vpack.c.b16 %v622, %v618
    %v663 = vpack.c.b16 %v623, %v619
    %v664 = vpack.c.b16 %v628, %v624
    %v665 = vpack.c.b16 %v629, %v625
    %v666 = vpack.c.b16 %v630, %v626
    %v667 = vpack.c.b16 %v631, %v627
    %v668 = vpack.c.b16 %v636, %v632
    %v669 = vpack.c.b16 %v637, %v633
    %v670 = vpack.c.b16 %v638, %v634
    %v671 = vpack.c.b16 %v639, %v635
    %704 = vmatprep.subr.bf16.mxu0 %v641
    %705 = vmatpush1.bf16.msra.mxu0 %v640
    %706 = vmatprep.subr.bf16.mxu0 %v645
    %707 = vmatpush1.bf16.msra.mxu0 %v644
    %708 = vmatprep.subr.bf16.mxu0 %v649
    %709 = vmatpush1.bf16.msra.mxu0 %v648
    %710 = vmatprep.subr.bf16.mxu0 %v653
    %711 = vmatpush1.bf16.msra.mxu0 %v652
    %712 = vmatprep.subr.bf16.mxu0 %v657
    %713 = vmatpush1.bf16.msra.mxu0 %v656
    %714 = vmatprep.subr.bf16.mxu0 %v661
    %715 = vmatpush1.bf16.msra.mxu0 %v660
    %716 = vmatprep.subr.bf16.mxu0 %v665
    %717 = vmatpush1.bf16.msra.mxu0 %v664
    %718 = vmatprep.subr.bf16.mxu0 %v669
    %719 = vmatpush1.bf16.msra.mxu0 %v668
    %720 = vmatprep.subr.bf16.mxu0 0
    %721 = vmatpush1.bf16.msra.mxu0 0
    %722 = vmatprep.subr.bf16.mxu0 0
    %723 = vmatpush1.bf16.msra.mxu0 0
    %724 = vmatprep.subr.bf16.mxu0 0
    %725 = vmatpush1.bf16.msra.mxu0 0
    %726 = vmatprep.subr.bf16.mxu0 0
    %727 = vmatpush1.bf16.msra.mxu0 0
    %728 = vmatprep.subr.bf16.mxu0 0
    %729 = vmatpush1.bf16.msra.mxu0 0
    %730 = vmatprep.subr.bf16.mxu0 0
    %731 = vmatpush1.bf16.msra.mxu0 0
    %732 = vmatprep.subr.bf16.mxu0 0
    %733 = vmatpush1.bf16.msra.mxu0 0
    %734 = vmatprep.subr.bf16.mxu0 0
    %735 = vmatpush1.bf16.msra.mxu0 0
    %736 = vmatprep.mubr.bf16.mxu0 0
    %737 = vmatmul.mubr.bf16.gmra.mrb[0].mxu0 %v487
    %v738 = vpop.f32.mrb[0].mxu0
    %v739 = vadd.f32 %v527, %v738
    %v740 = vpop.f32.mrb[0].mxu0
    %v741 = vadd.f32 %v531, %v740
    %v742 = vpop.f32.mrb[0].mxu0
    %v743 = vadd.f32 %v527, %v742
    %v744 = vpop.f32.mrb[0].mxu0
    %v745 = vadd.f32 %v531, %v744
    %746 = vdwg.mxu0
    %747 = vmatprep.subr.bf16.mxu0 %v643
    %748 = vmatpush1.bf16.msra.mxu0 %v642
    %749 = vmatprep.subr.bf16.mxu0 %v647
    %750 = vmatpush1.bf16.msra.mxu0 %v646
    %751 = vmatprep.subr.bf16.mxu0 %v651
    %752 = vmatpush1.bf16.msra.mxu0 %v650
    %753 = vmatprep.subr.bf16.mxu0 %v655
    %754 = vmatpush1.bf16.msra.mxu0 %v654
    %755 = vmatprep.subr.bf16.mxu0 %v659
    %756 = vmatpush1.bf16.msra.mxu0 %v658
    %757 = vmatprep.subr.bf16.mxu0 %v663
    %758 = vmatpush1.bf16.msra.mxu0 %v662
    %759 = vmatprep.subr.bf16.mxu0 %v667
    %760 = vmatpush1.bf16.msra.mxu0 %v666
    %761 = vmatprep.subr.bf16.mxu0 %v671
    %762 = vmatpush1.bf16.msra.mxu0 %v670
    %763 = vmatprep.subr.bf16.mxu0 0
    %764 = vmatpush1.bf16.msra.mxu0 0
    %765 = vmatprep.subr.bf16.mxu0 0
    %766 = vmatpush1.bf16.msra.mxu0 0
    %767 = vmatprep.subr.bf16.mxu0 0
    %768 = vmatpush1.bf16.msra.mxu0 0
    %769 = vmatprep.subr.bf16.mxu0 0
    %770 = vmatpush1.bf16.msra.mxu0 0
    %771 = vmatprep.subr.bf16.mxu0 0
    %772 = vmatpush1.bf16.msra.mxu0 0
    %773 = vmatprep.subr.bf16.mxu0 0
    %774 = vmatpush1.bf16.msra.mxu0 0
    %775 = vmatprep.subr.bf16.mxu0 0
    %776 = vmatpush1.bf16.msra.mxu0 0
    %777 = vmatprep.subr.bf16.mxu0 0
    %778 = vmatpush1.bf16.msra.mxu0 0
    %779 = vmatprep.mubr.bf16.mxu0 0
    %780 = vmatmul.mubr.bf16.gmra.mrb[0].mxu0 %v487
    %v781 = vpop.f32.mrb[0].mxu0
    %v782 = vadd.f32 %v535, %v781
    %v783 = vpop.f32.mrb[0].mxu0
    %v784 = vadd.f32 %v539, %v783
    %v785 = vpop.f32.mrb[0].mxu0
    %v786 = vadd.f32 %v535, %v785
    %v787 = vpop.f32.mrb[0].mxu0
    %v788 = vadd.f32 %v539, %v787
    %789 = vdwg.mxu0
    %v790 = vpack.c.bf16 %v743, %v739
    %v791 = vpack.c.bf16 %v745, %v741
    %v792 = vpack.c.bf16 %v786, %v782
    %793 = vmatprep.subr.bf16.mxu0 0
    %794 = vmatpush1.bf16.xpose.msra.mxu0 %v791
    %795 = vmatprep.subr.bf16.mxu0 0
    %796 = vmatpush1.bf16.xpose.msra.mxu0 0
    %797 = vmatprep.subr.bf16.mxu0 0
    %798 = vmatpush1.bf16.xpose.msra.mxu0 0
    %799 = vmatprep.subr.bf16.mxu0 0
    %800 = vmatpush1.bf16.xpose.msra.mxu0 0
    %801 = vmatprep.subr.bf16.mxu0 0
    %802 = vmatpush1.bf16.xpose.msra.mxu0 0
    %803 = vmatprep.subr.bf16.mxu0 0
    %804 = vmatpush1.bf16.xpose.msra.mxu0 0
    %805 = vmatprep.subr.bf16.mxu0 0
    %806 = vmatpush1.bf16.xpose.msra.mxu0 0
    %807 = vmatprep.subr.bf16.mxu0 0
    %808 = vmatpush1.bf16.xpose.msra.mxu0 0
    %809 = vmatprep.subr.bf16.mxu0 0
    %810 = vmatpush1.bf16.xpose.msra.mxu0 0
    %811 = vmatprep.subr.bf16.mxu0 0
    %812 = vmatpush1.bf16.xpose.msra.mxu0 0
    %813 = vmatprep.subr.bf16.mxu0 0
    %814 = vmatpush1.bf16.xpose.msra.mxu0 0
    %815 = vmatprep.subr.bf16.mxu0 0
    %816 = vmatpush1.bf16.xpose.msra.mxu0 0
    %817 = vmatprep.subr.bf16.mxu0 0
    %818 = vmatpush1.bf16.xpose.msra.mxu0 0
    %819 = vmatprep.subr.bf16.mxu0 0
    %820 = vmatpush1.bf16.xpose.msra.mxu0 0
    %821 = vmatprep.subr.bf16.mxu0 0
    %822 = vmatpush1.bf16.xpose.msra.mxu0 0
    %823 = vmatprep.subr.bf16.mxu0 0
    %824 = vmatpush1.bf16.xpose.msra.mxu0 0
    %825 = vmatprep.mubr.bf16.mxu0 0
    %826 = vmatmul.mubr.bf16.gmra.mrb[0].mxu0 %v790
    %v827 = vpop.f32.mrb[0].mxu0
    %v828 = vadd.f32 %v66, %v827
    %v829 = vpop.f32.mrb[0].mxu0
    %v830 = vpop.f32.mrb[0].mxu0
    %v831 = vadd.f32 %v67, %v830
    %v832 = vpop.f32.mrb[0].mxu0
    %833 = vdwg.mxu0
    %v834 = vsel %vm413, %v828, -inf
    %835 = vmax.xlane.f32.xlu0 %v834
    %v836 = vpop.xlane.xlu0 %835
    %v837 = vsel %vm413, %v831, -inf
    %838 = vmax.xlane.f32.xlu0 %v837
    %v839 = vpop.xlane.xlu0 %838
    %v840 = vsub.f32 %v828, %v836
    %v841 = vsub.f32 %v831, %v839
    %v842 = vmul.f32 %v840, 1.442695
    %v843 = vpow.pop %v842
    %v844 = vmul.f32 %v841, 1.442695
    %v845 = vpow.pop %v844
    %v846 = vmul.f32 %v843, %v62
    %v847 = vmul.f32 %v845, %v63
    %v848 = vsel %vm413, %v846, 0.0
    %849 = vadd.xlane.f32.xlu0 %v848
    %v850 = vpop.xlane.xlu0 %849
    %v851 = vsel %vm413, %v847, 0.0
    %852 = vadd.xlane.f32.xlu0 %v851
    %v853 = vpop.xlane.xlu0 %852
    %v854 = vmax.f32 %v850, 1e-30
    %v855 = vmax.f32 %v853, 1e-30
    %v856 = vrcp.pop %v854
    %v857 = vrcp.pop %v855
    %v858 = vmul.f32 %v846, %v856
    %v859 = vmul.f32 %v847, %v857
    %v860 = vpack.c.bf16 %v859, %v858
    %v862 = vsel %vm413, %v860, 0
    %864 = vmatprep.subr.bf16.mxu0 0
    %865 = vmatpush1.bf16.msra.mxu0 %v792
    %866 = vmatprep.subr.bf16.mxu0 0
    %867 = vmatpush1.bf16.msra.mxu0 0
    %868 = vmatprep.subr.bf16.mxu0 0
    %869 = vmatpush1.bf16.msra.mxu0 0
    %870 = vmatprep.subr.bf16.mxu0 0
    %871 = vmatpush1.bf16.msra.mxu0 0
    %872 = vmatprep.subr.bf16.mxu0 0
    %873 = vmatpush1.bf16.msra.mxu0 0
    %874 = vmatprep.subr.bf16.mxu0 0
    %875 = vmatpush1.bf16.msra.mxu0 0
    %876 = vmatprep.subr.bf16.mxu0 0
    %877 = vmatpush1.bf16.msra.mxu0 0
    %878 = vmatprep.subr.bf16.mxu0 0
    %879 = vmatpush1.bf16.msra.mxu0 0
    %880 = vmatprep.subr.bf16.mxu0 0
    %881 = vmatpush1.bf16.msra.mxu0 0
    %882 = vmatprep.subr.bf16.mxu0 0
    %883 = vmatpush1.bf16.msra.mxu0 0
    %884 = vmatprep.subr.bf16.mxu0 0
    %885 = vmatpush1.bf16.msra.mxu0 0
    %886 = vmatprep.subr.bf16.mxu0 0
    %887 = vmatpush1.bf16.msra.mxu0 0
    %888 = vmatprep.subr.bf16.mxu0 0
    %889 = vmatpush1.bf16.msra.mxu0 0
    %890 = vmatprep.subr.bf16.mxu0 0
    %891 = vmatpush1.bf16.msra.mxu0 0
    %892 = vmatprep.subr.bf16.mxu0 0
    %893 = vmatpush1.bf16.msra.mxu0 0
    %894 = vmatprep.subr.bf16.mxu0 0
    %895 = vmatpush1.bf16.msra.mxu0 0
    %896 = vmatprep.mubr.bf16.mxu0 0
    %897 = vmatmul.mubr.bf16.gmra.mrb[0].mxu0 %v862
    %v898 = vpop.f32.mrb[0].mxu0
    %v899 = vadd.f32 %v784, %v898
    %v900 = vpop.f32.mrb[0].mxu0
    %v901 = vpop.f32.mrb[0].mxu0
    %v902 = vadd.f32 %v788, %v901
    %v903 = vpop.f32.mrb[0].mxu0
    %904 = vdwg.mxu0
    %905 = vst [vmem:[#allocation8] sm:$0xff] %v899
    %906 = vst [vmem:[#allocation8 + $0x8] sm:$0xff] %v902
    // Predicated region
    $region30: #{tpu_custom_call.1} parent=1 // pred_check
      _
    $region31: #{tpu_custom_call.1} parent=1 // pred_check_branch
      %908 = sbr.rel (0) target = $region33
    $region32: #{tpu_custom_call.1} parent=1 // pred_region
      %s910 = ssub.s32 256, 256
      %911 = vsyncadd [#allocation4], %s910
      %s912 = sshll.u32 [#allocation8], 4
      %s913 = int_to_ptr.vmem [resolvable:$true] %s912
      %918 = dma.vmem_to_hbm [thread:$0]  %s913, 256, %s4, [#allocation4], 128, 128, 8
    $region33: #{tpu_custom_call.1} parent=1 // pred_fallthru
      _
    // Predicated region
    $region34: #{tpu_custom_call.1} parent=1 // pred_check
      _
    $region35: #{tpu_custom_call.1} parent=1 // pred_check_branch
      %920 = sbr.rel (0) target = $region37
    $region36: #{tpu_custom_call.1} parent=1 // pred_region
      %921 = dma.done [#allocation4], 256
    $region37: #{tpu_custom_call.1} parent=1 // pred_fallthru
      _
    %922 = vsyncpa [#allocation3], 1
    %923 = vsyncpa [#allocation6], 1
    %924 = vsyncpa [#allocation4], 1

</llo_original>
